<compile_context>
chip_gen: v7x
topology: tpu7x:2x2x1
jax: 0.10.0
libtpu: 0.0.40
codegen_flags: <defaults>
</compile_context>

<pallas_src>
import jax
import jax.numpy as jnp
from jax import lax
from jax.experimental import pallas as pl
from jax.experimental.pallas import tpu as pltpu

_WCOLS = 32  # padded weight-table width: 9 x-taps | 9 y-taps | 1 bias | zero pad


def _offcenter_taps(W):
    """The 8 non-center 3x3 taps as (tap_index, flat_offset, dh, dw)."""
    taps = []
    for kh in range(3):
        for kw in range(3):
            if kh == 1 and kw == 1:
                continue
            taps.append((kh * 3 + kw, (kh - 1) * W + (kw - 1), kh - 1, kw - 1))
    return taps


def _boundary_masks(H, W):
    """(8, H*W) f32 0/1 masks zeroing taps that fall in the conv's padding ring."""
    HW = H * W
    h_pos = jnp.arange(HW, dtype=jnp.int32) // W
    w_pos = jnp.arange(HW, dtype=jnp.int32) % W
    rows = []
    for (_, _, dh, dw) in _offcenter_taps(W):
        m = jnp.ones((HW,), jnp.bool_)
        if dh == -1:
            m = m & (h_pos >= 1)
        elif dh == 1:
            m = m & (h_pos <= H - 2)
        if dw == -1:
            m = m & (w_pos >= 1)
        elif dw == 1:
            m = m & (w_pos <= W - 2)
        rows.append(m.astype(jnp.float32))
    return jnp.stack(rows, axis=0)


def _vmem_limit_bytes() -> int:
    """Generation-aware scoped-VMEM limit (v5e/v6e: 64 MiB, v7x: 32 MiB)."""
    try:
        cap = int(pltpu.get_tpu_info().vmem_capacity_bytes)
    except Exception:
        cap = 64 * 1024 * 1024  # conservative (v7x per-TC physical VMEM)
    return max(32 * 1024 * 1024, min(cap // 2, 64 * 1024 * 1024))


def _make_mixing_kernel(H: int, W: int, eps: float):
    HW = H * W
    taps = _offcenter_taps(W)

    def kernel(alpha_ref, x_ref, y_ref, w_ref, m_ref, o_ref):
        # alpha_ref: SMEM f32[1]            shared PReLU alpha
        # x_ref/y_ref: VMEM [Rb, H*W]       one (b, c) instance per row, spatial flat
        # w_ref: VMEM f32[Rb, 32]           per-row conv weights/bias table
        # m_ref: VMEM f32[8, H*W]           boundary masks for the 8 off-center taps
        # o_ref: VMEM [Rb, H*W]
        alpha = alpha_ref[0]
        xf = x_ref[...].astype(jnp.float32)
        yf = y_ref[...].astype(jnp.float32)

        def tap(t, off, mi):
            # Per-row scaling commutes with the lane roll: pre-mix wx*x + wy*y,
            # then ONE XLU roll per tap (halves roll traffic vs rolling x and y).
            mix = w_ref[:, t:t + 1] * xf + w_ref[:, 9 + t:10 + t] * yf
            rolled = pltpu.roll(mix, shift=(-off) % HW, axis=1)
            return rolled * m_ref[mi:mi + 1, :]

        # Center tap (no roll, no mask) + bias seeds partial sum A; remaining
        # taps alternate between two partial sums (shorter serial add chains).
        acc_a = w_ref[:, 4:5] * xf + w_ref[:, 13:14] * yf + w_ref[:, 18:19]
        acc_b = tap(taps[0][0], taps[0][1], 0)
        for i, (t, off, _, _) in enumerate(taps[1:], start=1):
            c = tap(t, off, i)
            if i % 2 == 0:
                acc_a = acc_a + c
            else:
                acc_b = acc_b + c
        z = acc_a + acc_b

        # PReLU, single shared alpha.
        z = jnp.where(z >= 0, z, alpha * z)

        # InstanceNorm2d: per-(b, c) row over HxW, biased variance, two-pass.
        mean = jnp.mean(z, axis=1, keepdims=True)
        d = z - mean
        var = jnp.mean(d * d, axis=1, keepdims=True)
        o_ref[...] = (d * lax.rsqrt(var + eps)).astype(o_ref.dtype)

    return kernel


def mixing_block(x, y, weight, bias, alpha, *, eps: float = 1e-5):
    """x, y: [B, C, H, W]; weight: f32[C, 2, 3, 3]; bias: f32[C]; alpha: f32[1]."""
    B, C, H, W = x.shape
    HW = H * W
    rows = B * C

    # Lane-dense layout: one (b, c) instance per row, flattened spatial on lanes.
    # Native dtype is DMA'd (bf16 passthrough); upcast to f32 happens in-kernel.
    x2 = x.reshape(rows, HW)
    y2 = y.reshape(rows, HW)

    # Per-channel weight table: [9 x-taps | 9 y-taps | bias | pad] -> (C, 32).
    wtab_c = jnp.concatenate(
        [weight.reshape(C, 18).astype(jnp.float32),
         bias.reshape(C, 1).astype(jnp.float32),
         jnp.zeros((C, _WCOLS - 19), jnp.float32)],
        axis=1)

    masks = _boundary_masks(H, W)  # (8, HW) f32, static per (H, W)

    # ---- Row-chunk sizing: ~1 MiB (f32) per input block, >=4 grid steps when
    # rows permit (v7x megacore + pipelining), cdiv grid with partial last block
    # (safe: every op is per-row independent, OOB rows never contaminate valid ones).
    row_bytes = HW * 4
    target = max(8, ((1 << 20) // row_bytes) // 8 * 8)
    if rows <= 8:
        Rb = rows                      # block == full row dim (exempt from 8-align)
    else:
        Rb = max(8, min(target, rows) // 8 * 8)
        if rows >= 32:
            Rb = min(Rb, max(8, (rows // 4) // 8 * 8))
    grid_n = pl.cdiv(rows, Rb)

    # Weight rows: reuse one (Rb, 32) table (loaded once) when the per-block
    # channel pattern repeats; otherwise tile across the batch (128 B per row).
    if C <= Rb and Rb % C == 0:
        wtab = jnp.tile(wtab_c, (Rb // C, 1))          # (Rb, 32)
        w_index_map = lambda r: (0, 0)
    else:
        wtab = jnp.tile(wtab_c, (B, 1))                # (rows, 32)
        w_index_map = lambda r: (r, 0)

    out_dtype = x.dtype
    kernel = _make_mixing_kernel(H, W, eps)

    in_bytes = jnp.dtype(x.dtype).itemsize
    cost = pl.CostEstimate(
        flops=rows * HW * 55,
        transcendentals=rows,
        bytes_accessed=rows * HW * (2 * in_bytes + jnp.dtype(out_dtype).itemsize)
        + int(wtab.size) * 4 + int(masks.size) * 4,
    )

    out2 = pl.pallas_call(
        kernel,
        out_shape=jax.ShapeDtypeStruct((rows, HW), out_dtype),
        grid_spec=pltpu.PrefetchScalarGridSpec(
            num_scalar_prefetch=0,
            grid=(grid_n,),
            in_specs=[
                pl.BlockSpec(memory_space=pltpu.SMEM),         # PReLU alpha (scalar)
                # If v5e profiling shows exposed input DMAs, add
                # pipeline_mode=pl.Buffered(3) to the x/y specs (re-check VMEM).
                pl.BlockSpec((Rb, HW), lambda r: (r, 0)),      # x rows
                pl.BlockSpec((Rb, HW), lambda r: (r, 0)),      # y rows
                pl.BlockSpec((Rb, _WCOLS), w_index_map),       # conv weights/bias
                pl.BlockSpec((8, HW), lambda r: (0, 0)),       # boundary masks
            ],
            out_specs=pl.BlockSpec((Rb, HW), lambda r: (r, 0)),
        ),
        compiler_params=pltpu.CompilerParams(
            dimension_semantics=("parallel",),
            vmem_limit_bytes=_vmem_limit_bytes(),
        ),
        cost_estimate=cost,
    )(alpha.reshape(-1).astype(jnp.float32), x2, y2, wtab, masks)
    return out2.reshape(B, C, H, W)


def _reference(x, y, weight, bias, alpha, eps=1e-5):
    """Pure-JAX reference mirroring the PyTorch module exactly."""
    B, C, H, W = x.shape
    mixed = jnp.stack((x, y), axis=2).reshape(B, 2 * C, H, W)   # interleave channels
    z = lax.conv_general_dilated(
        mixed, weight, window_strides=(1, 1), padding=((1, 1), (1, 1)),
        dimension_numbers=("NCHW", "OIHW", "NCHW"), feature_group_count=C,
    ) + bias[None, :, None, None]
    z = jnp.where(z >= 0, z, alpha[0] * z)                       # PReLU
    mean = jnp.mean(z, axis=(2, 3), keepdims=True)
    var = jnp.mean((z - mean) ** 2, axis=(2, 3), keepdims=True)
    return (z - mean) * lax.rsqrt(var + eps)                     # InstanceNorm2d


if __name__ == "__main__":
    # Small shapes: B=2, C(=ch_out)=4, ch_in=2C=8, H=W=16
    B, C, H, W = 2, 4, 16, 16
    key = jax.random.PRNGKey(0)
    kx, ky, kw, kb = jax.random.split(key, 4)

    x = jax.random.normal(kx, (B, C, H, W), dtype=jnp.float32)
    y = jax.random.normal(ky, (B, C, H, W), dtype=jnp.float32)

    # Conv2d(2C, C, 3, groups=C) -> weight (C, 2, 3, 3), bias (C,), PReLU alpha 0.25
    weight = 0.1 * jax.random.normal(kw, (C, 2, 3, 3), dtype=jnp.float32)
    bias = 0.05 * jax.random.normal(kb, (C,), dtype=jnp.float32)
    alpha = jnp.array([0.25], dtype=jnp.float32)

    out = mixing_block(x, y, weight, bias, alpha)
    out = jax.block_until_ready(out)

    ref = _reference(x, y, weight, bias, alpha)
    assert out.shape == (B, C, H, W)
    assert jnp.allclose(out, ref, atol=1e-4, rtol=1e-4), "mismatch vs pure-JAX reference"
    print("KERNEL_OK")
</pallas_src>

<mosaic_0001>
module attributes {stable_mosaic.version = 11 : i64} {
  func.func @kernel(%arg0: i32, %arg1: memref<1xf32, #tpu.memory_space<smem>>, %arg2: memref<8x256xf32, #tpu.memory_space<vmem>>, %arg3: memref<8x256xf32, #tpu.memory_space<vmem>>, %arg4: memref<8x32xf32, #tpu.memory_space<vmem>>, %arg5: memref<8x256xf32, #tpu.memory_space<vmem>>, %arg6: memref<8x256xf32, #tpu.memory_space<vmem>>) attributes {dimension_semantics = [#tpu.dimension_semantics<parallel>], iteration_bounds = array<i64: 1>, scalar_prefetch = 0 : i64, scratch_operands = 0 : i64, tpu.core_type = #tpu.core_type<tc>, window_params = [{transform_indices = @transform_0, window_bounds = array<i64: 1>}, {transform_indices = @transform_1, window_bounds = array<i64: 8, 256>}, {transform_indices = @transform_2, window_bounds = array<i64: 8, 256>}, {pipeline_mode = #tpu.pipeline_mode<synchronous>, transform_indices = @transform_3, window_bounds = array<i64: 8, 32>}, {pipeline_mode = #tpu.pipeline_mode<synchronous>, transform_indices = @transform_4, window_bounds = array<i64: 8, 256>}, {transform_indices = @transform_5, window_bounds = array<i64: 8, 256>}]} {
    %c0 = arith.constant 0 : index
    %0 = memref.load %arg1[%c0] : memref<1xf32, #tpu.memory_space<smem>>
    %c0_0 = arith.constant 0 : index
    %c0_1 = arith.constant 0 : index
    %1 = vector.load %arg2[%c0_0, %c0_1] : memref<8x256xf32, #tpu.memory_space<vmem>>, vector<8x256xf32>
    %c0_2 = arith.constant 0 : index
    %c0_3 = arith.constant 0 : index
    %2 = vector.load %arg3[%c0_2, %c0_3] : memref<8x256xf32, #tpu.memory_space<vmem>>, vector<8x256xf32>
    %c0_4 = arith.constant 0 : index
    %c4 = arith.constant 4 : index
    %3 = vector.load %arg4[%c0_4, %c4] : memref<8x32xf32, #tpu.memory_space<vmem>>, vector<8x1xf32>
    %4 = vector.broadcast %3 : vector<8x1xf32> to vector<8x256xf32>
    %5 = arith.mulf %4, %1 : vector<8x256xf32>
    %c0_5 = arith.constant 0 : index
    %c13 = arith.constant 13 : index
    %6 = vector.load %arg4[%c0_5, %c13] : memref<8x32xf32, #tpu.memory_space<vmem>>, vector<8x1xf32>
    %7 = vector.broadcast %6 : vector<8x1xf32> to vector<8x256xf32>
    %8 = arith.mulf %7, %2 : vector<8x256xf32>
    %9 = arith.addf %5, %8 : vector<8x256xf32>
    %c0_6 = arith.constant 0 : index
    %c18 = arith.constant 18 : index
    %10 = vector.load %arg4[%c0_6, %c18] : memref<8x32xf32, #tpu.memory_space<vmem>>, vector<8x1xf32>
    %11 = vector.broadcast %10 : vector<8x1xf32> to vector<8x256xf32>
    %12 = arith.addf %9, %11 : vector<8x256xf32>
    %c0_7 = arith.constant 0 : index
    %c0_8 = arith.constant 0 : index
    %13 = vector.load %arg4[%c0_7, %c0_8] : memref<8x32xf32, #tpu.memory_space<vmem>>, vector<8x1xf32>
    %14 = vector.broadcast %13 : vector<8x1xf32> to vector<8x256xf32>
    %15 = arith.mulf %14, %1 : vector<8x256xf32>
    %c0_9 = arith.constant 0 : index
    %c9 = arith.constant 9 : index
    %16 = vector.load %arg4[%c0_9, %c9] : memref<8x32xf32, #tpu.memory_space<vmem>>, vector<8x1xf32>
    %17 = vector.broadcast %16 : vector<8x1xf32> to vector<8x256xf32>
    %18 = arith.mulf %17, %2 : vector<8x256xf32>
    %19 = arith.addf %15, %18 : vector<8x256xf32>
    %c17_i32 = arith.constant 17 : i32
    %20 = tpu.dynamic_rotate %19 by %c17_i32 dim 1 : vector<8x256xf32>, i32 -> vector<8x256xf32>
    %c0_10 = arith.constant 0 : index
    %c0_11 = arith.constant 0 : index
    %21 = vector.load %arg5[%c0_10, %c0_11] : memref<8x256xf32, #tpu.memory_space<vmem>>, vector<1x256xf32>
    %22 = vector.broadcast %21 : vector<1x256xf32> to vector<8x256xf32>
    %23 = arith.mulf %20, %22 : vector<8x256xf32>
    %c0_12 = arith.constant 0 : index
    %c1 = arith.constant 1 : index
    %24 = vector.load %arg4[%c0_12, %c1] : memref<8x32xf32, #tpu.memory_space<vmem>>, vector<8x1xf32>
    %25 = vector.broadcast %24 : vector<8x1xf32> to vector<8x256xf32>
    %26 = arith.mulf %25, %1 : vector<8x256xf32>
    %c0_13 = arith.constant 0 : index
    %c10 = arith.constant 10 : index
    %27 = vector.load %arg4[%c0_13, %c10] : memref<8x32xf32, #tpu.memory_space<vmem>>, vector<8x1xf32>
    %28 = vector.broadcast %27 : vector<8x1xf32> to vector<8x256xf32>
    %29 = arith.mulf %28, %2 : vector<8x256xf32>
    %30 = arith.addf %26, %29 : vector<8x256xf32>
    %c16_i32 = arith.constant 16 : i32
    %31 = tpu.dynamic_rotate %30 by %c16_i32 dim 1 : vector<8x256xf32>, i32 -> vector<8x256xf32>
    %c1_14 = arith.constant 1 : index
    %c0_15 = arith.constant 0 : index
    %32 = vector.load %arg5[%c1_14, %c0_15] : memref<8x256xf32, #tpu.memory_space<vmem>>, vector<1x256xf32>
    %33 = vector.broadcast %32 : vector<1x256xf32> to vector<8x256xf32>
    %34 = arith.mulf %31, %33 : vector<8x256xf32>
    %35 = arith.addf %23, %34 : vector<8x256xf32>
    %c0_16 = arith.constant 0 : index
    %c2 = arith.constant 2 : index
    %36 = vector.load %arg4[%c0_16, %c2] : memref<8x32xf32, #tpu.memory_space<vmem>>, vector<8x1xf32>
    %37 = vector.broadcast %36 : vector<8x1xf32> to vector<8x256xf32>
    %38 = arith.mulf %37, %1 : vector<8x256xf32>
    %c0_17 = arith.constant 0 : index
    %c11 = arith.constant 11 : index
    %39 = vector.load %arg4[%c0_17, %c11] : memref<8x32xf32, #tpu.memory_space<vmem>>, vector<8x1xf32>
    %40 = vector.broadcast %39 : vector<8x1xf32> to vector<8x256xf32>
    %41 = arith.mulf %40, %2 : vector<8x256xf32>
    %42 = arith.addf %38, %41 : vector<8x256xf32>
    %c15_i32 = arith.constant 15 : i32
    %43 = tpu.dynamic_rotate %42 by %c15_i32 dim 1 : vector<8x256xf32>, i32 -> vector<8x256xf32>
    %c2_18 = arith.constant 2 : index
    %c0_19 = arith.constant 0 : index
    %44 = vector.load %arg5[%c2_18, %c0_19] : memref<8x256xf32, #tpu.memory_space<vmem>>, vector<1x256xf32>
    %45 = vector.broadcast %44 : vector<1x256xf32> to vector<8x256xf32>
    %46 = arith.mulf %43, %45 : vector<8x256xf32>
    %47 = arith.addf %12, %46 : vector<8x256xf32>
    %c0_20 = arith.constant 0 : index
    %c3 = arith.constant 3 : index
    %48 = vector.load %arg4[%c0_20, %c3] : memref<8x32xf32, #tpu.memory_space<vmem>>, vector<8x1xf32>
    %49 = vector.broadcast %48 : vector<8x1xf32> to vector<8x256xf32>
    %50 = arith.mulf %49, %1 : vector<8x256xf32>
    %c0_21 = arith.constant 0 : index
    %c12 = arith.constant 12 : index
    %51 = vector.load %arg4[%c0_21, %c12] : memref<8x32xf32, #tpu.memory_space<vmem>>, vector<8x1xf32>
    %52 = vector.broadcast %51 : vector<8x1xf32> to vector<8x256xf32>
    %53 = arith.mulf %52, %2 : vector<8x256xf32>
    %54 = arith.addf %50, %53 : vector<8x256xf32>
    %c1_i32 = arith.constant 1 : i32
    %55 = tpu.dynamic_rotate %54 by %c1_i32 dim 1 : vector<8x256xf32>, i32 -> vector<8x256xf32>
    %c3_22 = arith.constant 3 : index
    %c0_23 = arith.constant 0 : index
    %56 = vector.load %arg5[%c3_22, %c0_23] : memref<8x256xf32, #tpu.memory_space<vmem>>, vector<1x256xf32>
    %57 = vector.broadcast %56 : vector<1x256xf32> to vector<8x256xf32>
    %58 = arith.mulf %55, %57 : vector<8x256xf32>
    %59 = arith.addf %35, %58 : vector<8x256xf32>
    %c0_24 = arith.constant 0 : index
    %c5 = arith.constant 5 : index
    %60 = vector.load %arg4[%c0_24, %c5] : memref<8x32xf32, #tpu.memory_space<vmem>>, vector<8x1xf32>
    %61 = vector.broadcast %60 : vector<8x1xf32> to vector<8x256xf32>
    %62 = arith.mulf %61, %1 : vector<8x256xf32>
    %c0_25 = arith.constant 0 : index
    %c14 = arith.constant 14 : index
    %63 = vector.load %arg4[%c0_25, %c14] : memref<8x32xf32, #tpu.memory_space<vmem>>, vector<8x1xf32>
    %64 = vector.broadcast %63 : vector<8x1xf32> to vector<8x256xf32>
    %65 = arith.mulf %64, %2 : vector<8x256xf32>
    %66 = arith.addf %62, %65 : vector<8x256xf32>
    %c255_i32 = arith.constant 255 : i32
    %67 = tpu.dynamic_rotate %66 by %c255_i32 dim 1 : vector<8x256xf32>, i32 -> vector<8x256xf32>
    %c4_26 = arith.constant 4 : index
    %c0_27 = arith.constant 0 : index
    %68 = vector.load %arg5[%c4_26, %c0_27] : memref<8x256xf32, #tpu.memory_space<vmem>>, vector<1x256xf32>
    %69 = vector.broadcast %68 : vector<1x256xf32> to vector<8x256xf32>
    %70 = arith.mulf %67, %69 : vector<8x256xf32>
    %71 = arith.addf %47, %70 : vector<8x256xf32>
    %c0_28 = arith.constant 0 : index
    %c6 = arith.constant 6 : index
    %72 = vector.load %arg4[%c0_28, %c6] : memref<8x32xf32, #tpu.memory_space<vmem>>, vector<8x1xf32>
    %73 = vector.broadcast %72 : vector<8x1xf32> to vector<8x256xf32>
    %74 = arith.mulf %73, %1 : vector<8x256xf32>
    %c0_29 = arith.constant 0 : index
    %c15 = arith.constant 15 : index
    %75 = vector.load %arg4[%c0_29, %c15] : memref<8x32xf32, #tpu.memory_space<vmem>>, vector<8x1xf32>
    %76 = vector.broadcast %75 : vector<8x1xf32> to vector<8x256xf32>
    %77 = arith.mulf %76, %2 : vector<8x256xf32>
    %78 = arith.addf %74, %77 : vector<8x256xf32>
    %c241_i32 = arith.constant 241 : i32
    %79 = tpu.dynamic_rotate %78 by %c241_i32 dim 1 : vector<8x256xf32>, i32 -> vector<8x256xf32>
    %c5_30 = arith.constant 5 : index
    %c0_31 = arith.constant 0 : index
    %80 = vector.load %arg5[%c5_30, %c0_31] : memref<8x256xf32, #tpu.memory_space<vmem>>, vector<1x256xf32>
    %81 = vector.broadcast %80 : vector<1x256xf32> to vector<8x256xf32>
    %82 = arith.mulf %79, %81 : vector<8x256xf32>
    %83 = arith.addf %59, %82 : vector<8x256xf32>
    %c0_32 = arith.constant 0 : index
    %c7 = arith.constant 7 : index
    %84 = vector.load %arg4[%c0_32, %c7] : memref<8x32xf32, #tpu.memory_space<vmem>>, vector<8x1xf32>
    %85 = vector.broadcast %84 : vector<8x1xf32> to vector<8x256xf32>
    %86 = arith.mulf %85, %1 : vector<8x256xf32>
    %c0_33 = arith.constant 0 : index
    %c16 = arith.constant 16 : index
    %87 = vector.load %arg4[%c0_33, %c16] : memref<8x32xf32, #tpu.memory_space<vmem>>, vector<8x1xf32>
    %88 = vector.broadcast %87 : vector<8x1xf32> to vector<8x256xf32>
    %89 = arith.mulf %88, %2 : vector<8x256xf32>
    %90 = arith.addf %86, %89 : vector<8x256xf32>
    %c240_i32 = arith.constant 240 : i32
    %91 = tpu.dynamic_rotate %90 by %c240_i32 dim 1 : vector<8x256xf32>, i32 -> vector<8x256xf32>
    %c6_34 = arith.constant 6 : index
    %c0_35 = arith.constant 0 : index
    %92 = vector.load %arg5[%c6_34, %c0_35] : memref<8x256xf32, #tpu.memory_space<vmem>>, vector<1x256xf32>
    %93 = vector.broadcast %92 : vector<1x256xf32> to vector<8x256xf32>
    %94 = arith.mulf %91, %93 : vector<8x256xf32>
    %95 = arith.addf %71, %94 : vector<8x256xf32>
    %c0_36 = arith.constant 0 : index
    %c8 = arith.constant 8 : index
    %96 = vector.load %arg4[%c0_36, %c8] : memref<8x32xf32, #tpu.memory_space<vmem>>, vector<8x1xf32>
    %97 = vector.broadcast %96 : vector<8x1xf32> to vector<8x256xf32>
    %98 = arith.mulf %97, %1 : vector<8x256xf32>
    %c0_37 = arith.constant 0 : index
    %c17 = arith.constant 17 : index
    %99 = vector.load %arg4[%c0_37, %c17] : memref<8x32xf32, #tpu.memory_space<vmem>>, vector<8x1xf32>
    %100 = vector.broadcast %99 : vector<8x1xf32> to vector<8x256xf32>
    %101 = arith.mulf %100, %2 : vector<8x256xf32>
    %102 = arith.addf %98, %101 : vector<8x256xf32>
    %c239_i32 = arith.constant 239 : i32
    %103 = tpu.dynamic_rotate %102 by %c239_i32 dim 1 : vector<8x256xf32>, i32 -> vector<8x256xf32>
    %c7_38 = arith.constant 7 : index
    %c0_39 = arith.constant 0 : index
    %104 = vector.load %arg5[%c7_38, %c0_39] : memref<8x256xf32, #tpu.memory_space<vmem>>, vector<1x256xf32>
    %105 = vector.broadcast %104 : vector<1x256xf32> to vector<8x256xf32>
    %106 = arith.mulf %103, %105 : vector<8x256xf32>
    %107 = arith.addf %83, %106 : vector<8x256xf32>
    %108 = arith.addf %95, %107 : vector<8x256xf32>
    %cst = arith.constant 0.000000e+00 : f32
    %109 = vector.broadcast %cst : f32 to vector<8x256xf32>
    %110 = arith.cmpf oge, %108, %109 : vector<8x256xf32>
    %111 = vector.broadcast %0 : f32 to vector<8x256xf32>
    %112 = arith.mulf %111, %108 : vector<8x256xf32>
    %113 = arith.select %110, %108, %112 : vector<8x256xi1>, vector<8x256xf32>
    %cst_40 = arith.constant dense<0.000000e+00> : vector<8xf32>
    %114 = vector.multi_reduction <add>, %113, %cst_40 [1] : vector<8x256xf32> to vector<8xf32>
    %115 = vector.shape_cast %114 : vector<8xf32> to vector<8x1xf32>
    %cst_41 = arith.constant 2.560000e+02 : f32
    %116 = vector.broadcast %cst_41 : f32 to vector<8x1xf32>
    %117 = arith.divf %115, %116 : vector<8x1xf32>
    %118 = vector.broadcast %117 : vector<8x1xf32> to vector<8x256xf32>
    %119 = arith.subf %113, %118 : vector<8x256xf32>
    %120 = arith.mulf %119, %119 : vector<8x256xf32>
    %cst_42 = arith.constant dense<0.000000e+00> : vector<8xf32>
    %121 = vector.multi_reduction <add>, %120, %cst_42 [1] : vector<8x256xf32> to vector<8xf32>
    %122 = vector.shape_cast %121 : vector<8xf32> to vector<8x1xf32>
    %cst_43 = arith.constant 2.560000e+02 : f32
    %123 = vector.broadcast %cst_43 : f32 to vector<8x1xf32>
    %124 = arith.divf %122, %123 : vector<8x1xf32>
    %cst_44 = arith.constant 9.99999974E-6 : f32
    %125 = vector.broadcast %cst_44 : f32 to vector<8x1xf32>
    %126 = arith.addf %124, %125 : vector<8x1xf32>
    %127 = math.rsqrt %126 : vector<8x1xf32>
    %128 = vector.broadcast %127 : vector<8x1xf32> to vector<8x256xf32>
    %129 = arith.mulf %119, %128 : vector<8x256xf32>
    %c0_45 = arith.constant 0 : index
    %c0_46 = arith.constant 0 : index
    %130 = vector.load %arg6[%c0_45, %c0_46] : memref<8x256xf32, #tpu.memory_space<vmem>>, vector<8x256xf32>
    tpu.vector_store %arg6[%c0_45, %c0_46], %129 {strides = array<i32>} : memref<8x256xf32, #tpu.memory_space<vmem>>, vector<8x256xf32>,
    return
  }
  func.func @transform_0(%arg0: i32) -> i32 {
    %c0_i32 = arith.constant 0 : i32
    %c0_i32_0 = arith.constant 0 : i32
    return %c0_i32 : i32
  }
  func.func @transform_1(%arg0: i32) -> (i32, i32) {
    %c0_i32 = arith.constant 0 : i32
    %c0_i32_0 = arith.constant 0 : i32
    return %arg0, %c0_i32 : i32, i32
  }
  func.func @transform_2(%arg0: i32) -> (i32, i32) {
    %c0_i32 = arith.constant 0 : i32
    %c0_i32_0 = arith.constant 0 : i32
    return %arg0, %c0_i32 : i32, i32
  }
  func.func @transform_3(%arg0: i32) -> (i32, i32) {
    %c0_i32 = arith.constant 0 : i32
    %c0_i32_0 = arith.constant 0 : i32
    %c0_i32_1 = arith.constant 0 : i32
    return %c0_i32, %c0_i32_0 : i32, i32
  }
  func.func @transform_4(%arg0: i32) -> (i32, i32) {
    %c0_i32 = arith.constant 0 : i32
    %c0_i32_0 = arith.constant 0 : i32
    %c0_i32_1 = arith.constant 0 : i32
    return %c0_i32, %c0_i32_0 : i32, i32
  }
  func.func @transform_5(%arg0: i32) -> (i32, i32) {
    %c0_i32 = arith.constant 0 : i32
    %c0_i32_0 = arith.constant 0 : i32
    return %arg0, %c0_i32 : i32, i32
  }
}

</mosaic_0001>

<llo_original>
// kernel: tpu_custom_call.1
$region0: #{tpu_custom_call.1}
  #allocation0 [shape = 'u32[]', space=smem, size = 0x4, offset = 0x4, fixed_abs, tag = 'smem constant byte address 0x4 - core index']
  #allocation1 [shape = 'u32[144,128]{1,0:T(1,128)}', space=vmem, size = 0x12000, scoped, tag = 'internal scratch']
  #allocation2 [shape = 'f32[1]{0:T(128)S(6)}', space=smem, size = 0x200, scoped, tag = 'scoped memory for tpu_custom_call.1']
  %s0 = inlined_call_operand.<no memory space> [shape: f32[1], index: 0, kind: input, shape index: {}]
  %s1 = inlined_call_operand.hbm [shape: f32[8,256], index: 1, kind: input, shape index: {}]
  %s2 = inlined_call_operand.hbm [shape: f32[8,256], index: 2, kind: input, shape index: {}]
  %s3 = inlined_call_operand.vmem [shape: f32[8,32], index: 3, kind: input, shape index: {}]
  %s4 = inlined_call_operand.hbm [shape: f32[8,256], index: 4, kind: input, shape index: {}]
  %s5 = inlined_call_operand.hbm [shape: f32[8,256], index: 5, kind: output, shape index: {}]
  %s6 = sld [smem:[#allocation0]]
  $region42: #{tpu_custom_call.1} parent=0
    _
  %s8 = ssub.s32 1, %s6
  %s9 = scalar_select 0, %s8, %s6
  %10 = sst [smem:[#allocation2]] %s0
  $region1: #{tpu_custom_call.1} parent=0
    #allocation3 [shape = 'u8[8192]{0}', space=vmem, size = 0x2000, scoped, tag = 'input window, operand 1, single buffered']
    #allocation4 [shape = 's32[1]{0}', space=sflag, size = 0x4, scoped, tag = 'scoped memory for tpu_custom_call.1']
    #allocation5 [shape = 's32[1]{0}', space=sflag, size = 0x4, scoped, tag = 'scoped memory for tpu_custom_call.1']
    #allocation6 [shape = 'u8[8192]{0}', space=vmem, size = 0x2000, scoped, tag = 'input window, operand 2, single buffered']
    #allocation7 [shape = 's32[1]{0}', space=sflag, size = 0x4, scoped, tag = 'scoped memory for tpu_custom_call.1']
    #allocation8 [shape = 'u8[8192]{0}', space=vmem, size = 0x2000, scoped, tag = 'input window, operand 4, single buffered']
    #allocation9 [shape = 'u8[8192]{0}', space=vmem, size = 0x2000, scoped, tag = 'output window, operand 0, single buffered']
    %11 = vsyncpa [#allocation4], 0
    %12 = vsyncpa [#allocation7], 0
    %13 = vsyncpa [#allocation5], 0
    // Predicated region
    $region2: #{tpu_custom_call.1} parent=1 // pred_check
      _
    $region3: #{tpu_custom_call.1} parent=1 // pred_check_branch
      %15 = sbr.rel (0) target = $region5
    $region4: #{tpu_custom_call.1} parent=1 // pred_region
      _
    $region5: #{tpu_custom_call.1} parent=1 // pred_fallthru
      _
    // Predicated region
    $region6: #{tpu_custom_call.1} parent=1 // pred_check
      _
    $region7: #{tpu_custom_call.1} parent=1 // pred_check_branch
      %17 = sbr.rel (0) target = $region9
    $region8: #{tpu_custom_call.1} parent=1 // pred_region
      %s19 = ssub.s32 256, 256
      %20 = vsyncadd [#allocation4], %s19
      %s22 = sshll.u32 [#allocation3], 4
      %s23 = int_to_ptr.vmem [resolvable:$true] %s22
      %25 = dma.hbm_to_vmem [thread:$0]  %s1, 256, %s23, [#allocation4]
    $region9: #{tpu_custom_call.1} parent=1 // pred_fallthru
      _
    // Predicated region
    $region10: #{tpu_custom_call.1} parent=1 // pred_check
      _
    $region11: #{tpu_custom_call.1} parent=1 // pred_check_branch
      %27 = sbr.rel (0) target = $region13
    $region12: #{tpu_custom_call.1} parent=1 // pred_region
      %s29 = ssub.s32 256, 256
      %30 = vsyncadd [#allocation7], %s29
      %s32 = sshll.u32 [#allocation6], 4
      %s33 = int_to_ptr.vmem [resolvable:$true] %s32
      %35 = dma.hbm_to_vmem [thread:$0]  %s2, 256, %s33, [#allocation7]
    $region13: #{tpu_custom_call.1} parent=1 // pred_fallthru
      _
    // Predicated region
    $region14: #{tpu_custom_call.1} parent=1 // pred_check
      _
    $region15: #{tpu_custom_call.1} parent=1 // pred_check_branch
      %37 = sbr.rel (0) target = $region17
    $region16: #{tpu_custom_call.1} parent=1 // pred_region
      _
    $region17: #{tpu_custom_call.1} parent=1 // pred_fallthru
      _
    // Predicated region
    $region18: #{tpu_custom_call.1} parent=1 // pred_check
      _
    $region19: #{tpu_custom_call.1} parent=1 // pred_check_branch
      %39 = sbr.rel (0) target = $region21
    $region20: #{tpu_custom_call.1} parent=1 // pred_region
      %s41 = ssub.s32 256, 256
      %42 = vsyncadd [#allocation7], %s41
      %s44 = sshll.u32 [#allocation8], 4
      %s45 = int_to_ptr.vmem [resolvable:$true] %s44
      %47 = dma.hbm_to_vmem [thread:$0]  %s4, 256, %s45, [#allocation7]
    $region21: #{tpu_custom_call.1} parent=1 // pred_fallthru
      _
    // Predicated region
    $region22: #{tpu_custom_call.1} parent=1 // pred_check
      _
    $region23: #{tpu_custom_call.1} parent=1 // pred_check_branch
      %49 = sbr.rel (0) target = $region25
    $region24: #{tpu_custom_call.1} parent=1 // pred_region
      %50 = dma.done [#allocation4], 256
    $region25: #{tpu_custom_call.1} parent=1 // pred_fallthru
      _
    // Predicated region
    $region26: #{tpu_custom_call.1} parent=1 // pred_check
      _
    $region27: #{tpu_custom_call.1} parent=1 // pred_check_branch
      %52 = sbr.rel (0) target = $region29
    $region28: #{tpu_custom_call.1} parent=1 // pred_region
      %53 = dma.done [#allocation7], 256
    $region29: #{tpu_custom_call.1} parent=1 // pred_fallthru
      _
    // Predicated region
    $region30: #{tpu_custom_call.1} parent=1 // pred_check
      _
    $region31: #{tpu_custom_call.1} parent=1 // pred_check_branch
      %55 = sbr.rel (0) target = $region33
    $region32: #{tpu_custom_call.1} parent=1 // pred_region
      %56 = dma.done [#allocation7], 256
    $region33: #{tpu_custom_call.1} parent=1 // pred_fallthru
      _
    %s57 = sld [smem:[#allocation2]]
    %v58 = vld [vmem:[#allocation3] sm:$0xff]
    %v59 = vld [vmem:[#allocation3 + $0x8] sm:$0xff]
    %v60 = vld [vmem:[#allocation6] sm:$0xff]
    %v61 = vld [vmem:[#allocation6 + $0x8] sm:$0xff]
    %v62 = vld [vmem:[%s3] sm:$0xff]
    %64 = vset.pattern.permute.xlu0 4
    %65 = vperm.xlu0 %64, %v62
    %v66 = vpop.permute.xlu0 %65
    %v68 = vmul.f32 %v66, %v58
    %v69 = vmul.f32 %v66, %v59
    %70 = vset.pattern.permute.xlu0 13
    %71 = vperm.xlu0 %70, %v62
    %v72 = vpop.permute.xlu0 %71
    %v74 = vmul.f32 %v72, %v60
    %v75 = vmul.f32 %v72, %v61
    %v76 = vadd.f32 %v68, %v74
    %v77 = vadd.f32 %v69, %v75
    %78 = vset.pattern.permute.xlu0 18
    %79 = vperm.xlu0 %78, %v62
    %v80 = vpop.permute.xlu0 %79
    %v82 = vadd.f32 %v76, %v80
    %v83 = vadd.f32 %v77, %v80
    %84 = vset.pattern.permute.xlu0 0
    %85 = vperm.xlu0 %84, %v62
    %v86 = vpop.permute.xlu0 %85
    %v88 = vmul.f32 %v86, %v58
    %v89 = vmul.f32 %v86, %v59
    %90 = vset.pattern.permute.xlu0 9
    %91 = vperm.xlu0 %90, %v62
    %v92 = vpop.permute.xlu0 %91
    %v94 = vmul.f32 %v92, %v60
    %v95 = vmul.f32 %v92, %v61
    %v96 = vadd.f32 %v88, %v94
    %v97 = vadd.f32 %v89, %v95
    %98 = vrot.lane.b32.xlu0 %v96, 17
    %v99 = vpop.permute.xlu0 %98
    %100 = vrot.lane.b32.xlu0 %v97, 17
    %v101 = vpop.permute.xlu0 %100
    %v102 = vlaneseq
    %v103 = vand.u32 %v102, 127
    %vm104 = vcmp.lt.s32.totalorder %v103, 17
    %v105 = vsel %vm104, %v99, %v101
    %v106 = vsel %vm104, %v101, %v99
    %v107 = vld [vmem:[#allocation8] ss:$8 sm:$0x3]
    %v109 = vlaneseq
    %v110 = vshrl.u32 %v109, 7
    %v111 = vsub.s32 0, %v110
    %v112 = vrot.slane %v107, %v111
    %v113 = vlaneseq
    %v114 = vshrl.u32 %v113, 7
    %v115 = vsub.s32 1, %v114
    %v116 = vrot.slane %v107, %v115
    %v119 = vmul.f32 %v106, %v112
    %v120 = vmul.f32 %v105, %v116
    %121 = vset.pattern.permute.xlu0 1
    %122 = vperm.xlu0 %121, %v62
    %v123 = vpop.permute.xlu0 %122
    %v125 = vmul.f32 %v123, %v58
    %v126 = vmul.f32 %v123, %v59
    %127 = vset.pattern.permute.xlu0 10
    %128 = vperm.xlu0 %127, %v62
    %v129 = vpop.permute.xlu0 %128
    %v131 = vmul.f32 %v129, %v60
    %v132 = vmul.f32 %v129, %v61
    %v133 = vadd.f32 %v125, %v131
    %v134 = vadd.f32 %v126, %v132
    %135 = vrot.lane.b32.xlu0 %v133, 16
    %v136 = vpop.permute.xlu0 %135
    %137 = vrot.lane.b32.xlu0 %v134, 16
    %v138 = vpop.permute.xlu0 %137
    %vm139 = vcmp.lt.s32.totalorder %v103, 16
    %v140 = vsel %vm139, %v136, %v138
    %v141 = vsel %vm139, %v138, %v136
    %s142 = scalar_lea.vmem [#allocation8], 1
    %v143 = vld [vmem:[%s142] ss:$8 sm:$0x3]
    %v145 = vlaneseq
    %v146 = vshrl.u32 %v145, 7
    %v147 = vsub.s32 0, %v146
    %v148 = vrot.slane %v143, %v147
    %v149 = vlaneseq
    %v150 = vshrl.u32 %v149, 7
    %v151 = vsub.s32 1, %v150
    %v152 = vrot.slane %v143, %v151
    %v155 = vmul.f32 %v141, %v148
    %v156 = vmul.f32 %v140, %v152
    %v157 = vadd.f32 %v119, %v155
    %v158 = vadd.f32 %v120, %v156
    %159 = vset.pattern.permute.xlu0 2
    %160 = vperm.xlu0 %159, %v62
    %v161 = vpop.permute.xlu0 %160
    %v163 = vmul.f32 %v161, %v58
    %v164 = vmul.f32 %v161, %v59
    %165 = vset.pattern.permute.xlu0 11
    %166 = vperm.xlu0 %165, %v62
    %v167 = vpop.permute.xlu0 %166
    %v169 = vmul.f32 %v167, %v60
    %v170 = vmul.f32 %v167, %v61
    %v171 = vadd.f32 %v163, %v169
    %v172 = vadd.f32 %v164, %v170
    %173 = vrot.lane.b32.xlu0 %v171, 15
    %v174 = vpop.permute.xlu0 %173
    %175 = vrot.lane.b32.xlu0 %v172, 15
    %v176 = vpop.permute.xlu0 %175
    %vm177 = vcmp.lt.s32.totalorder %v103, 15
    %v178 = vsel %vm177, %v174, %v176
    %v179 = vsel %vm177, %v176, %v174
    %s180 = scalar_lea.vmem [#allocation8], 2
    %v181 = vld [vmem:[%s180] ss:$8 sm:$0x3]
    %v183 = vlaneseq
    %v184 = vshrl.u32 %v183, 7
    %v185 = vsub.s32 0, %v184
    %v186 = vrot.slane %v181, %v185
    %v187 = vlaneseq
    %v188 = vshrl.u32 %v187, 7
    %v189 = vsub.s32 1, %v188
    %v190 = vrot.slane %v181, %v189
    %v193 = vmul.f32 %v179, %v186
    %v194 = vmul.f32 %v178, %v190
    %v195 = vadd.f32 %v82, %v193
    %v196 = vadd.f32 %v83, %v194
    %197 = vset.pattern.permute.xlu0 3
    %198 = vperm.xlu0 %197, %v62
    %v199 = vpop.permute.xlu0 %198
    %v201 = vmul.f32 %v199, %v58
    %v202 = vmul.f32 %v199, %v59
    %203 = vset.pattern.permute.xlu0 12
    %204 = vperm.xlu0 %203, %v62
    %v205 = vpop.permute.xlu0 %204
    %v207 = vmul.f32 %v205, %v60
    %v208 = vmul.f32 %v205, %v61
    %v209 = vadd.f32 %v201, %v207
    %v210 = vadd.f32 %v202, %v208
    %211 = vrot.lane.b32.xlu0 %v209, 1
    %v212 = vpop.permute.xlu0 %211
    %213 = vrot.lane.b32.xlu0 %v210, 1
    %v214 = vpop.permute.xlu0 %213
    %vm215 = vcmp.lt.s32.totalorder %v103, 1
    %v216 = vsel %vm215, %v212, %v214
    %v217 = vsel %vm215, %v214, %v212
    %s218 = scalar_lea.vmem [#allocation8], 3
    %v219 = vld [vmem:[%s218] ss:$8 sm:$0x3]
    %v221 = vlaneseq
    %v222 = vshrl.u32 %v221, 7
    %v223 = vsub.s32 0, %v222
    %v224 = vrot.slane %v219, %v223
    %v225 = vlaneseq
    %v226 = vshrl.u32 %v225, 7
    %v227 = vsub.s32 1, %v226
    %v228 = vrot.slane %v219, %v227
    %v231 = vmul.f32 %v217, %v224
    %v232 = vmul.f32 %v216, %v228
    %v233 = vadd.f32 %v157, %v231
    %v234 = vadd.f32 %v158, %v232
    %235 = vset.pattern.permute.xlu0 5
    %236 = vperm.xlu0 %235, %v62
    %v237 = vpop.permute.xlu0 %236
    %v239 = vmul.f32 %v237, %v58
    %v240 = vmul.f32 %v237, %v59
    %241 = vset.pattern.permute.xlu0 14
    %242 = vperm.xlu0 %241, %v62
    %v243 = vpop.permute.xlu0 %242
    %v245 = vmul.f32 %v243, %v60
    %v246 = vmul.f32 %v243, %v61
    %v247 = vadd.f32 %v239, %v245
    %v248 = vadd.f32 %v240, %v246
    %249 = vrot.lane.b32.xlu0 %v247, 127
    %v250 = vpop.permute.xlu0 %249
    %251 = vrot.lane.b32.xlu0 %v248, 127
    %v252 = vpop.permute.xlu0 %251
    %vm253 = vcmp.lt.s32.totalorder %v103, 127
    %v254 = vsel %vm253, %v250, %v252
    %v255 = vsel %vm253, %v252, %v250
    %s256 = scalar_lea.vmem [#allocation8], 4
    %v257 = vld [vmem:[%s256] ss:$8 sm:$0x3]
    %v259 = vlaneseq
    %v260 = vshrl.u32 %v259, 7
    %v261 = vsub.s32 0, %v260
    %v262 = vrot.slane %v257, %v261
    %v263 = vlaneseq
    %v264 = vshrl.u32 %v263, 7
    %v265 = vsub.s32 1, %v264
    %v266 = vrot.slane %v257, %v265
    %v269 = vmul.f32 %v254, %v262
    %v270 = vmul.f32 %v255, %v266
    %v271 = vadd.f32 %v195, %v269
    %v272 = vadd.f32 %v196, %v270
    %273 = vset.pattern.permute.xlu0 6
    %274 = vperm.xlu0 %273, %v62
    %v275 = vpop.permute.xlu0 %274
    %v277 = vmul.f32 %v275, %v58
    %v278 = vmul.f32 %v275, %v59
    %279 = vset.pattern.permute.xlu0 15
    %280 = vperm.xlu0 %279, %v62
    %v281 = vpop.permute.xlu0 %280
    %v283 = vmul.f32 %v281, %v60
    %v284 = vmul.f32 %v281, %v61
    %v285 = vadd.f32 %v277, %v283
    %v286 = vadd.f32 %v278, %v284
    %287 = vrot.lane.b32.xlu0 %v285, 113
    %v288 = vpop.permute.xlu0 %287
    %289 = vrot.lane.b32.xlu0 %v286, 113
    %v290 = vpop.permute.xlu0 %289
    %vm291 = vcmp.lt.s32.totalorder %v103, 113
    %v292 = vsel %vm291, %v288, %v290
    %v293 = vsel %vm291, %v290, %v288
    %s294 = scalar_lea.vmem [#allocation8], 5
    %v295 = vld [vmem:[%s294] ss:$8 sm:$0x3]
    %v297 = vlaneseq
    %v298 = vshrl.u32 %v297, 7
    %v299 = vsub.s32 0, %v298
    %v300 = vrot.slane %v295, %v299
    %v301 = vlaneseq
    %v302 = vshrl.u32 %v301, 7
    %v303 = vsub.s32 1, %v302
    %v304 = vrot.slane %v295, %v303
    %v307 = vmul.f32 %v292, %v300
    %v308 = vmul.f32 %v293, %v304
    %v309 = vadd.f32 %v233, %v307
    %v310 = vadd.f32 %v234, %v308
    %311 = vset.pattern.permute.xlu0 7
    %312 = vperm.xlu0 %311, %v62
    %v313 = vpop.permute.xlu0 %312
    %v315 = vmul.f32 %v313, %v58
    %v316 = vmul.f32 %v313, %v59
    %317 = vset.pattern.permute.xlu0 16
    %318 = vperm.xlu0 %317, %v62
    %v319 = vpop.permute.xlu0 %318
    %v321 = vmul.f32 %v319, %v60
    %v322 = vmul.f32 %v319, %v61
    %v323 = vadd.f32 %v315, %v321
    %v324 = vadd.f32 %v316, %v322
    %325 = vrot.lane.b32.xlu0 %v323, 112
    %v326 = vpop.permute.xlu0 %325
    %327 = vrot.lane.b32.xlu0 %v324, 112
    %v328 = vpop.permute.xlu0 %327
    %vm329 = vcmp.lt.s32.totalorder %v103, 112
    %v330 = vsel %vm329, %v326, %v328
    %v331 = vsel %vm329, %v328, %v326
    %s332 = scalar_lea.vmem [#allocation8], 6
    %v333 = vld [vmem:[%s332] ss:$8 sm:$0x3]
    %v335 = vlaneseq
    %v336 = vshrl.u32 %v335, 7
    %v337 = vsub.s32 0, %v336
    %v338 = vrot.slane %v333, %v337
    %v339 = vlaneseq
    %v340 = vshrl.u32 %v339, 7
    %v341 = vsub.s32 1, %v340
    %v342 = vrot.slane %v333, %v341
    %v345 = vmul.f32 %v330, %v338
    %v346 = vmul.f32 %v331, %v342
    %v347 = vadd.f32 %v271, %v345
    %v348 = vadd.f32 %v272, %v346
    %349 = vset.pattern.permute.xlu0 8
    %350 = vperm.xlu0 %349, %v62
    %v351 = vpop.permute.xlu0 %350
    %v353 = vmul.f32 %v351, %v58
    %v354 = vmul.f32 %v351, %v59
    %355 = vset.pattern.permute.xlu0 17
    %356 = vperm.xlu0 %355, %v62
    %v357 = vpop.permute.xlu0 %356
    %v359 = vmul.f32 %v357, %v60
    %v360 = vmul.f32 %v357, %v61
    %v361 = vadd.f32 %v353, %v359
    %v362 = vadd.f32 %v354, %v360
    %363 = vrot.lane.b32.xlu0 %v361, 111
    %v364 = vpop.permute.xlu0 %363
    %365 = vrot.lane.b32.xlu0 %v362, 111
    %v366 = vpop.permute.xlu0 %365
    %vm367 = vcmp.lt.s32.totalorder %v103, 111
    %v368 = vsel %vm367, %v364, %v366
    %v369 = vsel %vm367, %v366, %v364
    %s370 = scalar_lea.vmem [#allocation8], 7
    %v371 = vld [vmem:[%s370] ss:$8 sm:$0x3]
    %v373 = vlaneseq
    %v374 = vshrl.u32 %v373, 7
    %v375 = vsub.s32 0, %v374
    %v376 = vrot.slane %v371, %v375
    %v377 = vlaneseq
    %v378 = vshrl.u32 %v377, 7
    %v379 = vsub.s32 1, %v378
    %v380 = vrot.slane %v371, %v379
    %v383 = vmul.f32 %v368, %v376
    %v384 = vmul.f32 %v369, %v380
    %v385 = vadd.f32 %v309, %v383
    %v386 = vadd.f32 %v310, %v384
    %v387 = vadd.f32 %v347, %v385
    %v388 = vadd.f32 %v348, %v386
    %vm389 = vcmp.ge.f32.partialorder %v387, 0.0
    %vm390 = vcmp.ge.f32.partialorder %v388, 0.0
    %v391 = vstv %s57
    %v392 = vmul.f32 %v391, %v387
    %v393 = vmul.f32 %v391, %v388
    %v394 = vsel %vm389, %v387, %v392
    %v395 = vsel %vm390, %v388, %v393
    %v396 = vadd.f32 %v394, %v395
    %397 = vadd.xlane.f32.xlu0 %v396
    %v398 = vpop.xlane.xlu0 %397
    %v399 = vrcp.pop 256.0
    %v400 = vmul.f32 %v398, %v399
    %v401 = vsub.f32 %v394, %v400
    %v402 = vsub.f32 %v395, %v400
    %v403 = vmul.f32 %v401, %v401
    %v404 = vmul.f32 %v402, %v402
    %v405 = vadd.f32 %v403, %v404
    %406 = vadd.xlane.f32.xlu0 %v405
    %v407 = vpop.xlane.xlu0 %406
    %v408 = vmul.f32 %v407, %v399
    %v409 = vadd.f32 %v408, 1e-05
    %v410 = vrsqrt.pop %v409
    %v411 = vmul.f32 %v401, %v410
    %v412 = vmul.f32 %v402, %v410
    %413 = vst [vmem:[#allocation9] sm:$0xff] %v411
    %414 = vst [vmem:[#allocation9 + $0x8] sm:$0xff] %v412
    // Predicated region
    $region34: #{tpu_custom_call.1} parent=1 // pred_check
      _
    $region35: #{tpu_custom_call.1} parent=1 // pred_check_branch
      %416 = sbr.rel (0) target = $region37
    $region36: #{tpu_custom_call.1} parent=1 // pred_region
      %s418 = ssub.s32 256, 256
      %419 = vsyncadd [#allocation5], %s418
      %s421 = sshll.u32 [#allocation9], 4
      %s422 = int_to_ptr.vmem [resolvable:$true] %s421
      %424 = dma.vmem_to_hbm [thread:$0]  %s422, 256, %s5, [#allocation5]
    $region37: #{tpu_custom_call.1} parent=1 // pred_fallthru
      _
    // Predicated region
    $region38: #{tpu_custom_call.1} parent=1 // pred_check
      _
    $region39: #{tpu_custom_call.1} parent=1 // pred_check_branch
      %426 = sbr.rel (0) target = $region41
    $region40: #{tpu_custom_call.1} parent=1 // pred_region
      %427 = dma.done [#allocation5], 256
    $region41: #{tpu_custom_call.1} parent=1 // pred_fallthru
      _
    %428 = vsyncpa [#allocation4], 1
    %429 = vsyncpa [#allocation7], 1
    %430 = vsyncpa [#allocation5], 1

</llo_original>
